<compile_context>
chip_gen: v5e
topology: v5e:2x2
jax: 0.10.0
libtpu: 0.0.40
codegen_flags: <defaults>
</compile_context>

<pallas_src>
import functools

import jax
import jax.numpy as jnp
from jax.experimental import pallas as pl
from jax.experimental.pallas import tpu as pltpu

LOG_STD_MIN = -5.0
LOG_STD_MAX = 2.0


def _round_up(x, m):
    return (x + m - 1) // m * m


def _actor_kernel(obs_ref, w1_ref, b1_ref, w2_ref, b2_ref,
                  w3m_ref, b3m_ref, w3s_ref, b3s_ref,
                  mu_ref, std_ref, mean_ref, *, matmul_dtype):
    """One batch tile of: Linear->ReLU->Linear->ReLU->(mu head, log_std head)."""
    x = obs_ref[...]

    # Layer 1: Linear -> ReLU (MXU matmul, f32 accumulate; bias/ReLU on VPU in f32).
    h = jnp.dot(x.astype(matmul_dtype), w1_ref[...].astype(matmul_dtype),
                preferred_element_type=jnp.float32) + b1_ref[...]
    h = jnp.maximum(h, 0.0)

    # Layer 2: Linear -> ReLU.
    h = jnp.dot(h.astype(matmul_dtype), w2_ref[...].astype(matmul_dtype),
                preferred_element_type=jnp.float32) + b2_ref[...]
    h = jnp.maximum(h, 0.0)
    h = h.astype(matmul_dtype)

    # Head: two independent dots -> direct dense stores (no lane slicing).
    mu = jnp.dot(h, w3m_ref[...].astype(matmul_dtype),
                 preferred_element_type=jnp.float32) + b3m_ref[...]
    log_std = jnp.dot(h, w3s_ref[...].astype(matmul_dtype),
                      preferred_element_type=jnp.float32) + b3s_ref[...]

    # SAC log_std squashing: tanh -> affine into [LOG_STD_MIN, LOG_STD_MAX] -> exp.
    log_std = jnp.tanh(log_std)
    log_std = LOG_STD_MIN + 0.5 * (LOG_STD_MAX - LOG_STD_MIN) * (log_std + 1.0)
    std = jnp.exp(log_std)

    mu_ref[...] = mu.astype(mu_ref.dtype)
    std_ref[...] = std.astype(std_ref.dtype)
    # SquashedNormal(mu, std).mean == tanh(mu) (the test_action path); EUP has
    # slack here so fusing it is essentially free.
    mean_ref[...] = jnp.tanh(mu).astype(mean_ref.dtype)


def _default_block_m(B, obs_dim, hidden_dim, action_dim,
                     vmem_budget_bytes=8 * 1024 * 1024):
    """Pick a batch tile (multiple of 8, <=512) that keeps pipelined tiles small.

    Budget is deliberately conservative (<= 8 MiB of pipelined per-tile data,
    x2 for double buffering) so it fits v7x's smaller VMEM as well as v5e/v6e.
    """
    per_row = 4 * (obs_dim + 2 * hidden_dim + 3 * action_dim)  # f32 bytes / row
    bm = 512
    while bm > 8 and 2 * bm * per_row > vmem_budget_bytes:
        bm //= 2
    return min(bm, _round_up(B, 8))


@functools.partial(jax.jit,
                   static_argnames=("action_dim", "block_m", "use_bf16_matmul"))
def actor_forward(obs, params, *, action_dim, block_m=None,
                  use_bf16_matmul=False):
    """Returns (mu, std, mean_action) of the SquashedNormal policy distribution.

    mean_action == tanh(mu) == SquashedNormal(mu, std).mean.
    """
    w1, b1, w2, b2, w3m, b3m, w3s, b3s = params
    B, obs_dim = obs.shape
    hidden_dim = w1.shape[1]

    if block_m is None:
        block_m = _default_block_m(B, obs_dim, hidden_dim, action_dim)
    B_pad = _round_up(B, block_m)
    if B_pad != B:
        obs = jnp.pad(obs, ((0, B_pad - B), (0, 0)))

    matmul_dtype = jnp.bfloat16 if use_bf16_matmul else jnp.float32
    kernel = functools.partial(_actor_kernel, matmul_dtype=matmul_dtype)

    grid = (B_pad // block_m,)

    # Batch-tiled I/O tiles (pipelined) vs. resident weights/biases.
    obs_spec = pl.BlockSpec((block_m, obs_dim), lambda i: (i, 0))
    out_spec = pl.BlockSpec((block_m, action_dim), lambda i: (i, 0))

    def resident(arr):
        return pl.BlockSpec(arr.shape, lambda i: (0, 0))

    mu, std, mean_action = pl.pallas_call(
        kernel,
        out_shape=(
            jax.ShapeDtypeStruct((B_pad, action_dim), jnp.float32),
            jax.ShapeDtypeStruct((B_pad, action_dim), jnp.float32),
            jax.ShapeDtypeStruct((B_pad, action_dim), jnp.float32),
        ),
        grid=grid,
        in_specs=[
            obs_spec,
            resident(w1), resident(b1),
            resident(w2), resident(b2),
            resident(w3m), resident(b3m),
            resident(w3s), resident(b3s),
        ],
        out_specs=(out_spec, out_spec, out_spec),
        compiler_params=pltpu.CompilerParams(
            dimension_semantics=("parallel",),     # shard batch over TCs on v7x
            vmem_limit_bytes=32 * 1024 * 1024,     # explicit, fits all chips
        ),
    )(obs, w1, b1, w2, b2, w3m, b3m, w3s, b3s)

    if B_pad != B:
        mu = mu[:B]
        std = std[:B]
        mean_action = mean_action[:B]
    return mu, std, mean_action


def init_actor_params(key, obs_dim, hidden_dim, action_dim):
    """Synthetic init mirroring weight_init (orthogonal W, zero b).

    Weights stored as (in_dim, out_dim); the head is pre-split into the mu and
    log_std halves (matching torch .chunk(2, dim=-1) column order)."""
    k1, k2, k3 = jax.random.split(key, 3)
    ortho = jax.nn.initializers.orthogonal()
    w1 = ortho(k1, (obs_dim, hidden_dim), jnp.float32)
    b1 = jnp.zeros((1, hidden_dim), jnp.float32)
    w2 = ortho(k2, (hidden_dim, hidden_dim), jnp.float32)
    b2 = jnp.zeros((1, hidden_dim), jnp.float32)
    w3 = ortho(k3, (hidden_dim, 2 * action_dim), jnp.float32)
    b3 = jnp.zeros((1, 2 * action_dim), jnp.float32)
    w3_mu, w3_ls = w3[:, :action_dim], w3[:, action_dim:]
    b3_mu, b3_ls = b3[:, :action_dim], b3[:, action_dim:]
    return (w1, b1, w2, b2, w3_mu, b3_mu, w3_ls, b3_ls)


def actor_forward_ref(obs, params):
    """Pure-JAX reference of Actor.forward (returns mu, std, tanh(mu))."""
    w1, b1, w2, b2, w3m, b3m, w3s, b3s = params
    h = jnp.maximum(obs @ w1 + b1, 0.0)
    h = jnp.maximum(h @ w2 + b2, 0.0)
    mu = h @ w3m + b3m
    log_std = jnp.tanh(h @ w3s + b3s)
    log_std = LOG_STD_MIN + 0.5 * (LOG_STD_MAX - LOG_STD_MIN) * (log_std + 1.0)
    return mu, jnp.exp(log_std), jnp.tanh(mu)


# TODO(synk): SquashedNormal.rsample / log_prob (stochastic sampling for
# get_action) involve RNG + tanh log-det glue and are left to plain JAX on top
# of the (mu, std) returned here.

if __name__ == "__main__":
    # Small shapes consistent with the module:
    # obs_dim=32, action_dim=8, hidden_dim=32, hidden_depth=2, batch=8.
    B, OBS_DIM, ACTION_DIM, HIDDEN_DIM = 8, 32, 8, 32

    key = jax.random.PRNGKey(0)
    k_obs, k_params = jax.random.split(key)
    obs = jax.random.normal(k_obs, (B, OBS_DIM), dtype=jnp.float32)
    params = init_actor_params(k_params, OBS_DIM, HIDDEN_DIM, ACTION_DIM)

    mu, std, mean_action = actor_forward(obs, params, action_dim=ACTION_DIM)
    jax.block_until_ready((mu, std, mean_action))

    mu_r, std_r, mean_r = actor_forward_ref(obs, params)
    assert jnp.allclose(mu, mu_r, atol=1e-5, rtol=1e-5)
    assert jnp.allclose(std, std_r, atol=1e-5, rtol=1e-5)
    assert jnp.allclose(mean_action, mean_r, atol=1e-5, rtol=1e-5)

    print("KERNEL_OK")
</pallas_src>

<mosaic_0001>
module attributes {stable_mosaic.version = 11 : i64} {
  func.func @_actor_kernel(%arg0: i32, %arg1: memref<8x32xf32, #tpu.memory_space<vmem>>, %arg2: memref<32x32xf32, #tpu.memory_space<vmem>>, %arg3: memref<1x32xf32, #tpu.memory_space<vmem>>, %arg4: memref<32x32xf32, #tpu.memory_space<vmem>>, %arg5: memref<1x32xf32, #tpu.memory_space<vmem>>, %arg6: memref<32x8xf32, #tpu.memory_space<vmem>>, %arg7: memref<1x8xf32, #tpu.memory_space<vmem>>, %arg8: memref<32x8xf32, #tpu.memory_space<vmem>>, %arg9: memref<1x8xf32, #tpu.memory_space<vmem>>, %arg10: memref<8x8xf32, #tpu.memory_space<vmem>>, %arg11: memref<8x8xf32, #tpu.memory_space<vmem>>, %arg12: memref<8x8xf32, #tpu.memory_space<vmem>>) attributes {dimension_semantics = [#tpu.dimension_semantics<parallel>], iteration_bounds = array<i64: 1>, scalar_prefetch = 0 : i64, scratch_operands = 0 : i64, tpu.core_type = #tpu.core_type<tc>, window_params = [{transform_indices = @transform_0, window_bounds = array<i64: 8, 32>}, {pipeline_mode = #tpu.pipeline_mode<synchronous>, transform_indices = @transform_1, window_bounds = array<i64: 32, 32>}, {pipeline_mode = #tpu.pipeline_mode<synchronous>, transform_indices = @transform_2, window_bounds = array<i64: 1, 32>}, {pipeline_mode = #tpu.pipeline_mode<synchronous>, transform_indices = @transform_3, window_bounds = array<i64: 32, 32>}, {pipeline_mode = #tpu.pipeline_mode<synchronous>, transform_indices = @transform_4, window_bounds = array<i64: 1, 32>}, {pipeline_mode = #tpu.pipeline_mode<synchronous>, transform_indices = @transform_5, window_bounds = array<i64: 32, 8>}, {pipeline_mode = #tpu.pipeline_mode<synchronous>, transform_indices = @transform_6, window_bounds = array<i64: 1, 8>}, {pipeline_mode = #tpu.pipeline_mode<synchronous>, transform_indices = @transform_7, window_bounds = array<i64: 32, 8>}, {pipeline_mode = #tpu.pipeline_mode<synchronous>, transform_indices = @transform_8, window_bounds = array<i64: 1, 8>}, {transform_indices = @transform_9, window_bounds = array<i64: 8, 8>}, {transform_indices = @transform_10, window_bounds = array<i64: 8, 8>}, {transform_indices = @transform_11, window_bounds = array<i64: 8, 8>}]} {
    %c0 = arith.constant 0 : index
    %c0_0 = arith.constant 0 : index
    %0 = vector.load %arg1[%c0, %c0_0] : memref<8x32xf32, #tpu.memory_space<vmem>>, vector<8x32xf32>
    %c0_1 = arith.constant 0 : index
    %c0_2 = arith.constant 0 : index
    %1 = vector.load %arg2[%c0_1, %c0_2] : memref<32x32xf32, #tpu.memory_space<vmem>>, vector<32x32xf32>
    %cst = arith.constant dense<0.000000e+00> : vector<8x32xf32>
    %2 = tpu.matmul %0, %1, %cst {dimension_numbers = #tpu.dot_dimension_numbers<[1], [0], [0], [1], [0, 0, 1, 1], [], []>} : vector<8x32xf32>, vector<32x32xf32>, vector<8x32xf32> -> vector<8x32xf32>
    %c0_3 = arith.constant 0 : index
    %c0_4 = arith.constant 0 : index
    %3 = vector.load %arg3[%c0_3, %c0_4] : memref<1x32xf32, #tpu.memory_space<vmem>>, vector<1x32xf32>
    %4 = vector.broadcast %3 : vector<1x32xf32> to vector<8x32xf32>
    %5 = arith.addf %2, %4 : vector<8x32xf32>
    %cst_5 = arith.constant 0.000000e+00 : f32
    %6 = vector.broadcast %cst_5 : f32 to vector<8x32xf32>
    %7 = arith.maximumf %5, %6 : vector<8x32xf32>
    %c0_6 = arith.constant 0 : index
    %c0_7 = arith.constant 0 : index
    %8 = vector.load %arg4[%c0_6, %c0_7] : memref<32x32xf32, #tpu.memory_space<vmem>>, vector<32x32xf32>
    %cst_8 = arith.constant dense<0.000000e+00> : vector<8x32xf32>
    %9 = tpu.matmul %7, %8, %cst_8 {dimension_numbers = #tpu.dot_dimension_numbers<[1], [0], [0], [1], [0, 0, 1, 1], [], []>} : vector<8x32xf32>, vector<32x32xf32>, vector<8x32xf32> -> vector<8x32xf32>
    %c0_9 = arith.constant 0 : index
    %c0_10 = arith.constant 0 : index
    %10 = vector.load %arg5[%c0_9, %c0_10] : memref<1x32xf32, #tpu.memory_space<vmem>>, vector<1x32xf32>
    %11 = vector.broadcast %10 : vector<1x32xf32> to vector<8x32xf32>
    %12 = arith.addf %9, %11 : vector<8x32xf32>
    %cst_11 = arith.constant 0.000000e+00 : f32
    %13 = vector.broadcast %cst_11 : f32 to vector<8x32xf32>
    %14 = arith.maximumf %12, %13 : vector<8x32xf32>
    %c0_12 = arith.constant 0 : index
    %c0_13 = arith.constant 0 : index
    %15 = vector.load %arg6[%c0_12, %c0_13] : memref<32x8xf32, #tpu.memory_space<vmem>>, vector<32x8xf32>
    %cst_14 = arith.constant dense<0.000000e+00> : vector<8x8xf32>
    %16 = tpu.matmul %14, %15, %cst_14 {dimension_numbers = #tpu.dot_dimension_numbers<[1], [0], [0], [1], [0, 0, 1, 1], [], []>} : vector<8x32xf32>, vector<32x8xf32>, vector<8x8xf32> -> vector<8x8xf32>
    %c0_15 = arith.constant 0 : index
    %c0_16 = arith.constant 0 : index
    %17 = vector.load %arg7[%c0_15, %c0_16] : memref<1x8xf32, #tpu.memory_space<vmem>>, vector<1x8xf32>
    %18 = vector.broadcast %17 : vector<1x8xf32> to vector<8x8xf32>
    %19 = arith.addf %16, %18 : vector<8x8xf32>
    %c0_17 = arith.constant 0 : index
    %c0_18 = arith.constant 0 : index
    %20 = vector.load %arg8[%c0_17, %c0_18] : memref<32x8xf32, #tpu.memory_space<vmem>>, vector<32x8xf32>
    %cst_19 = arith.constant dense<0.000000e+00> : vector<8x8xf32>
    %21 = tpu.matmul %14, %20, %cst_19 {dimension_numbers = #tpu.dot_dimension_numbers<[1], [0], [0], [1], [0, 0, 1, 1], [], []>} : vector<8x32xf32>, vector<32x8xf32>, vector<8x8xf32> -> vector<8x8xf32>
    %c0_20 = arith.constant 0 : index
    %c0_21 = arith.constant 0 : index
    %22 = vector.load %arg9[%c0_20, %c0_21] : memref<1x8xf32, #tpu.memory_space<vmem>>, vector<1x8xf32>
    %23 = vector.broadcast %22 : vector<1x8xf32> to vector<8x8xf32>
    %24 = arith.addf %21, %23 : vector<8x8xf32>
    %25 = math.tanh %24 : vector<8x8xf32>
    %cst_22 = arith.constant 1.000000e+00 : f32
    %26 = vector.broadcast %cst_22 : f32 to vector<8x8xf32>
    %27 = arith.addf %25, %26 : vector<8x8xf32>
    %cst_23 = arith.constant 3.500000e+00 : f32
    %28 = vector.broadcast %cst_23 : f32 to vector<8x8xf32>
    %29 = arith.mulf %28, %27 : vector<8x8xf32>
    %cst_24 = arith.constant -5.000000e+00 : f32
    %30 = vector.broadcast %cst_24 : f32 to vector<8x8xf32>
    %31 = arith.addf %30, %29 : vector<8x8xf32>
    %32 = math.exp %31 : vector<8x8xf32>
    %c0_25 = arith.constant 0 : index
    %c0_26 = arith.constant 0 : index
    %33 = vector.load %arg10[%c0_25, %c0_26] : memref<8x8xf32, #tpu.memory_space<vmem>>, vector<8x8xf32>
    tpu.vector_store %arg10[%c0_25, %c0_26], %19 {strides = array<i32>} : memref<8x8xf32, #tpu.memory_space<vmem>>, vector<8x8xf32>,
    %c0_27 = arith.constant 0 : index
    %c0_28 = arith.constant 0 : index
    %34 = vector.load %arg11[%c0_27, %c0_28] : memref<8x8xf32, #tpu.memory_space<vmem>>, vector<8x8xf32>
    tpu.vector_store %arg11[%c0_27, %c0_28], %32 {strides = array<i32>} : memref<8x8xf32, #tpu.memory_space<vmem>>, vector<8x8xf32>,
    %35 = math.tanh %19 : vector<8x8xf32>
    %c0_29 = arith.constant 0 : index
    %c0_30 = arith.constant 0 : index
    %36 = vector.load %arg12[%c0_29, %c0_30] : memref<8x8xf32, #tpu.memory_space<vmem>>, vector<8x8xf32>
    tpu.vector_store %arg12[%c0_29, %c0_30], %35 {strides = array<i32>} : memref<8x8xf32, #tpu.memory_space<vmem>>, vector<8x8xf32>,
    return
  }
  func.func @transform_0(%arg0: i32) -> (i32, i32) {
    %c0_i32 = arith.constant 0 : i32
    %c0_i32_0 = arith.constant 0 : i32
    return %arg0, %c0_i32 : i32, i32
  }
  func.func @transform_1(%arg0: i32) -> (i32, i32) {
    %c0_i32 = arith.constant 0 : i32
    %c0_i32_0 = arith.constant 0 : i32
    %c0_i32_1 = arith.constant 0 : i32
    return %c0_i32, %c0_i32_0 : i32, i32
  }
  func.func @transform_2(%arg0: i32) -> (i32, i32) {
    %c0_i32 = arith.constant 0 : i32
    %c0_i32_0 = arith.constant 0 : i32
    %c0_i32_1 = arith.constant 0 : i32
    return %c0_i32, %c0_i32_0 : i32, i32
  }
  func.func @transform_3(%arg0: i32) -> (i32, i32) {
    %c0_i32 = arith.constant 0 : i32
    %c0_i32_0 = arith.constant 0 : i32
    %c0_i32_1 = arith.constant 0 : i32
    return %c0_i32, %c0_i32_0 : i32, i32
  }
  func.func @transform_4(%arg0: i32) -> (i32, i32) {
    %c0_i32 = arith.constant 0 : i32
    %c0_i32_0 = arith.constant 0 : i32
    %c0_i32_1 = arith.constant 0 : i32
    return %c0_i32, %c0_i32_0 : i32, i32
  }
  func.func @transform_5(%arg0: i32) -> (i32, i32) {
    %c0_i32 = arith.constant 0 : i32
    %c0_i32_0 = arith.constant 0 : i32
    %c0_i32_1 = arith.constant 0 : i32
    return %c0_i32, %c0_i32_0 : i32, i32
  }
  func.func @transform_6(%arg0: i32) -> (i32, i32) {
    %c0_i32 = arith.constant 0 : i32
    %c0_i32_0 = arith.constant 0 : i32
    %c0_i32_1 = arith.constant 0 : i32
    return %c0_i32, %c0_i32_0 : i32, i32
  }
  func.func @transform_7(%arg0: i32) -> (i32, i32) {
    %c0_i32 = arith.constant 0 : i32
    %c0_i32_0 = arith.constant 0 : i32
    %c0_i32_1 = arith.constant 0 : i32
    return %c0_i32, %c0_i32_0 : i32, i32
  }
  func.func @transform_8(%arg0: i32) -> (i32, i32) {
    %c0_i32 = arith.constant 0 : i32
    %c0_i32_0 = arith.constant 0 : i32
    %c0_i32_1 = arith.constant 0 : i32
    return %c0_i32, %c0_i32_0 : i32, i32
  }
  func.func @transform_9(%arg0: i32) -> (i32, i32) {
    %c0_i32 = arith.constant 0 : i32
    %c0_i32_0 = arith.constant 0 : i32
    return %arg0, %c0_i32 : i32, i32
  }
  func.func @transform_10(%arg0: i32) -> (i32, i32) {
    %c0_i32 = arith.constant 0 : i32
    %c0_i32_0 = arith.constant 0 : i32
    return %arg0, %c0_i32 : i32, i32
  }
  func.func @transform_11(%arg0: i32) -> (i32, i32) {
    %c0_i32 = arith.constant 0 : i32
    %c0_i32_0 = arith.constant 0 : i32
    return %arg0, %c0_i32 : i32, i32
  }
}

</mosaic_0001>

<llo_original>
// kernel: actor_forward.1
$region0: #{actor_forward.1}
  #allocation0 [shape = 'u32[]', space=smem, size = 0x4, offset = 0x4, fixed_abs, tag = 'smem constant byte address 0x4 - core index']
  #allocation1 [shape = 'u32[72,128]{1,0:T(1,128)}', space=vmem, size = 0x9000, scoped, tag = 'internal scratch']
  %s0 = inlined_call_operand.vmem [shape: f32[8,32], index: 0, kind: input, shape index: {}]
  %s1 = inlined_call_operand.vmem [shape: f32[32,32], index: 1, kind: input, shape index: {}]
  %s2 = inlined_call_operand.vmem [shape: f32[1,32], index: 2, kind: input, shape index: {}]
  %s3 = inlined_call_operand.vmem [shape: f32[32,32], index: 3, kind: input, shape index: {}]
  %s4 = inlined_call_operand.vmem [shape: f32[1,32], index: 4, kind: input, shape index: {}]
  %s5 = inlined_call_operand.vmem [shape: f32[32,8], index: 5, kind: input, shape index: {}]
  %s6 = inlined_call_operand.vmem [shape: f32[1,8], index: 6, kind: input, shape index: {}]
  %s7 = inlined_call_operand.vmem [shape: f32[32,8], index: 7, kind: input, shape index: {}]
  %s8 = inlined_call_operand.vmem [shape: f32[1,8], index: 8, kind: input, shape index: {}]
  %s9 = inlined_call_operand.hbm [shape: f32[8,8], index: 9, kind: output, shape index: {0}]
  %s10 = inlined_call_operand.hbm [shape: f32[8,8], index: 10, kind: output, shape index: {1}]
  %s11 = inlined_call_operand.hbm [shape: f32[8,8], index: 11, kind: output, shape index: {2}]
  %12 = xla_tuple %s9, %s10, %s11
  %s13 = sld [smem:[#allocation0]]
  $region62: #{actor_forward.1} parent=0
    _
  %s15 = ssub.s32 1, %s13
  %s16 = scalar_select 0, %s15, %s13
  $region1: #{actor_forward.1} parent=0
    #allocation2 [shape = 'u8[4096]{0}', space=vmem, size = 0x1000, scoped, tag = 'output window, operand 0, single buffered']
    #allocation3 [shape = 's32[1]{0}', space=sflag, size = 0x4, scoped, tag = 'scoped memory for actor_forward.1']
    #allocation4 [shape = 'u8[4096]{0}', space=vmem, size = 0x1000, scoped, tag = 'output window, operand 1, single buffered']
    #allocation5 [shape = 's32[1]{0}', space=sflag, size = 0x4, scoped, tag = 'scoped memory for actor_forward.1']
    #allocation6 [shape = 'u8[4096]{0}', space=vmem, size = 0x1000, scoped, tag = 'output window, operand 2, single buffered']
    %17 = vsyncpa [#allocation3], 0
    %18 = vsyncpa [#allocation5], 0
    // Predicated region
    $region2: #{actor_forward.1} parent=1 // pred_check
      _
    $region3: #{actor_forward.1} parent=1 // pred_check_branch
      %20 = sbr.rel (0) target = $region5
    $region4: #{actor_forward.1} parent=1 // pred_region
      _
    $region5: #{actor_forward.1} parent=1 // pred_fallthru
      _
    // Predicated region
    $region6: #{actor_forward.1} parent=1 // pred_check
      _
    $region7: #{actor_forward.1} parent=1 // pred_check_branch
      %22 = sbr.rel (0) target = $region9
    $region8: #{actor_forward.1} parent=1 // pred_region
      _
    $region9: #{actor_forward.1} parent=1 // pred_fallthru
      _
    // Predicated region
    $region10: #{actor_forward.1} parent=1 // pred_check
      _
    $region11: #{actor_forward.1} parent=1 // pred_check_branch
      %24 = sbr.rel (0) target = $region13
    $region12: #{actor_forward.1} parent=1 // pred_region
      _
    $region13: #{actor_forward.1} parent=1 // pred_fallthru
      _
    // Predicated region
    $region14: #{actor_forward.1} parent=1 // pred_check
      _
    $region15: #{actor_forward.1} parent=1 // pred_check_branch
      %26 = sbr.rel (0) target = $region17
    $region16: #{actor_forward.1} parent=1 // pred_region
      _
    $region17: #{actor_forward.1} parent=1 // pred_fallthru
      _
    // Predicated region
    $region18: #{actor_forward.1} parent=1 // pred_check
      _
    $region19: #{actor_forward.1} parent=1 // pred_check_branch
      %28 = sbr.rel (0) target = $region21
    $region20: #{actor_forward.1} parent=1 // pred_region
      _
    $region21: #{actor_forward.1} parent=1 // pred_fallthru
      _
    // Predicated region
    $region22: #{actor_forward.1} parent=1 // pred_check
      _
    $region23: #{actor_forward.1} parent=1 // pred_check_branch
      %30 = sbr.rel (0) target = $region25
    $region24: #{actor_forward.1} parent=1 // pred_region
      _
    $region25: #{actor_forward.1} parent=1 // pred_fallthru
      _
    // Predicated region
    $region26: #{actor_forward.1} parent=1 // pred_check
      _
    $region27: #{actor_forward.1} parent=1 // pred_check_branch
      %32 = sbr.rel (0) target = $region29
    $region28: #{actor_forward.1} parent=1 // pred_region
      _
    $region29: #{actor_forward.1} parent=1 // pred_fallthru
      _
    // Predicated region
    $region30: #{actor_forward.1} parent=1 // pred_check
      _
    $region31: #{actor_forward.1} parent=1 // pred_check_branch
      %34 = sbr.rel (0) target = $region33
    $region32: #{actor_forward.1} parent=1 // pred_region
      _
    $region33: #{actor_forward.1} parent=1 // pred_fallthru
      _
    // Predicated region
    $region34: #{actor_forward.1} parent=1 // pred_check
      _
    $region35: #{actor_forward.1} parent=1 // pred_check_branch
      %36 = sbr.rel (0) target = $region37
    $region36: #{actor_forward.1} parent=1 // pred_region
      _
    $region37: #{actor_forward.1} parent=1 // pred_fallthru
      _
    %v37 = vld [vmem:[%s0] sm:$0xff]
    %v38 = vld [vmem:[%s1] sm:$0xff]
    %v39 = vld [vmem:[%s1 + $0x8] sm:$0xff]
    %v40 = vld [vmem:[%s1 + $0x10] sm:$0xff]
    %v41 = vld [vmem:[%s1 + $0x18] sm:$0xff]
    %v42 = vld [vmem:[%s2] sm:$0x1]
    %v44 = vperm.slane %v42, 0
    %vm46 = vcmask 261120
    %v48 = vsel %vm46, %v37, 0
    %50 = vmatpush.msra.mxu0 0.0
    %51 = vmatpush.msra.mxu0 0.0
    %52 = vmatpush.msra.mxu0 0.0
    %53 = vmatpush.msra.mxu0 0.0
    %54 = vmatpush.msra.mxu0 0.0
    %55 = vmatpush.msra.mxu0 0.0
    %56 = vmatpush.msra.mxu0 0.0
    %57 = vmatpush.msra.mxu0 0.0
    %58 = vmatpush.msra.mxu0 0.0
    %59 = vmatpush.msra.mxu0 0.0
    %60 = vmatpush.msra.mxu0 0.0
    %61 = vmatpush.msra.mxu0 0.0
    %62 = vmatpush.msra.mxu0 %v41
    %63 = vmatpush.msra.mxu0 %v40
    %64 = vmatpush.msra.mxu0 %v39
    %65 = vmatpush.msra.mxu0 %v38
    %66 = vmatmul.f32.gmra.mxu0 %v48
    %v67 = vpop.f32.mrf.mxu0
    %v68 = vadd.f32 %v44, %v67
    %69 = vdwg.mxu0
    %v70 = vmax.f32 %v68, 0.0
    %v71 = vld [vmem:[%s3] sm:$0xff]
    %v72 = vld [vmem:[%s3 + $0x8] sm:$0xff]
    %v73 = vld [vmem:[%s3 + $0x10] sm:$0xff]
    %v74 = vld [vmem:[%s3 + $0x18] sm:$0xff]
    %v75 = vld [vmem:[%s4] sm:$0x1]
    %v77 = vperm.slane %v75, 0
    %v80 = vsel %vm46, %v70, 0
    %82 = vmatpush.msra.mxu0 0.0
    %83 = vmatpush.msra.mxu0 0.0
    %84 = vmatpush.msra.mxu0 0.0
    %85 = vmatpush.msra.mxu0 0.0
    %86 = vmatpush.msra.mxu0 0.0
    %87 = vmatpush.msra.mxu0 0.0
    %88 = vmatpush.msra.mxu0 0.0
    %89 = vmatpush.msra.mxu0 0.0
    %90 = vmatpush.msra.mxu0 0.0
    %91 = vmatpush.msra.mxu0 0.0
    %92 = vmatpush.msra.mxu0 0.0
    %93 = vmatpush.msra.mxu0 0.0
    %94 = vmatpush.msra.mxu0 %v74
    %95 = vmatpush.msra.mxu0 %v73
    %96 = vmatpush.msra.mxu0 %v72
    %97 = vmatpush.msra.mxu0 %v71
    %98 = vmatmul.f32.gmra.mxu0 %v80
    %v99 = vpop.f32.mrf.mxu0
    %v100 = vadd.f32 %v77, %v99
    %101 = vdwg.mxu0
    %v102 = vmax.f32 %v100, 0.0
    %v103 = vld [vmem:[%s5] sm:$0xff]
    %v104 = vld [vmem:[%s5 + $0x8] sm:$0xff]
    %v105 = vld [vmem:[%s5 + $0x10] sm:$0xff]
    %v106 = vld [vmem:[%s5 + $0x18] sm:$0xff]
    %v107 = vld [vmem:[%s6] sm:$0x1]
    %v109 = vperm.slane %v107, 0
    %v112 = vsel %vm46, %v102, 0
    %114 = vmatpush.msra.mxu0 0.0
    %115 = vmatpush.msra.mxu0 0.0
    %116 = vmatpush.msra.mxu0 0.0
    %117 = vmatpush.msra.mxu0 0.0
    %118 = vmatpush.msra.mxu0 0.0
    %119 = vmatpush.msra.mxu0 0.0
    %120 = vmatpush.msra.mxu0 0.0
    %121 = vmatpush.msra.mxu0 0.0
    %122 = vmatpush.msra.mxu0 0.0
    %123 = vmatpush.msra.mxu0 0.0
    %124 = vmatpush.msra.mxu0 0.0
    %125 = vmatpush.msra.mxu0 0.0
    %126 = vmatpush.msra.mxu0 %v106
    %127 = vmatpush.msra.mxu0 %v105
    %128 = vmatpush.msra.mxu0 %v104
    %129 = vmatpush.msra.mxu0 %v103
    %130 = vmatmul.f32.gmra.mxu0 %v112
    %v131 = vpop.f32.mrf.mxu0
    %v132 = vadd.f32 %v109, %v131
    %133 = vdwg.mxu0
    %v134 = vld [vmem:[%s7] sm:$0xff]
    %v135 = vld [vmem:[%s7 + $0x8] sm:$0xff]
    %v136 = vld [vmem:[%s7 + $0x10] sm:$0xff]
    %v137 = vld [vmem:[%s7 + $0x18] sm:$0xff]
    %v138 = vld [vmem:[%s8] sm:$0x1]
    %v140 = vperm.slane %v138, 0
    %142 = vmatpush.msra.mxu0 0.0
    %143 = vmatpush.msra.mxu0 0.0
    %144 = vmatpush.msra.mxu0 0.0
    %145 = vmatpush.msra.mxu0 0.0
    %146 = vmatpush.msra.mxu0 0.0
    %147 = vmatpush.msra.mxu0 0.0
    %148 = vmatpush.msra.mxu0 0.0
    %149 = vmatpush.msra.mxu0 0.0
    %150 = vmatpush.msra.mxu0 0.0
    %151 = vmatpush.msra.mxu0 0.0
    %152 = vmatpush.msra.mxu0 0.0
    %153 = vmatpush.msra.mxu0 0.0
    %154 = vmatpush.msra.mxu0 %v137
    %155 = vmatpush.msra.mxu0 %v136
    %156 = vmatpush.msra.mxu0 %v135
    %157 = vmatpush.msra.mxu0 %v134
    %158 = vmatmul.f32.gmra.mxu0 %v112
    %v159 = vpop.f32.mrf.mxu0
    %v160 = vadd.f32 %v140, %v159
    %161 = vdwg.mxu0
    %v162 = vtanh.pop %v160
    %v163 = vadd.f32 %v162, 1.0
    %v164 = vmul.f32 %v163, 3.5
    %v165 = vadd.f32 %v164, -5.0
    %v166 = vmul.f32 %v165, 1.442695
    %v167 = vpow.pop %v166
    %vm168 = vcmask 64512
    %169 = vst.msk [vmem:[#allocation2] sm:$0xff] %vm168, %v132
    %170 = vst.msk [vmem:[#allocation4] sm:$0xff] %vm168, %v167
    %v171 = vtanh.pop %v132
    %172 = vst.msk [vmem:[#allocation6] sm:$0xff] %vm168, %v171
    // Predicated region
    $region38: #{actor_forward.1} parent=1 // pred_check
      _
    $region39: #{actor_forward.1} parent=1 // pred_check_branch
      %174 = sbr.rel (0) target = $region41
    $region40: #{actor_forward.1} parent=1 // pred_region
      %176 = vsyncadd [#allocation3], 0
      %s178 = sshll.u32 [#allocation2], 4
      %s179 = int_to_ptr.vmem [resolvable:$true] %s178
      %s180 = sshll.u32 %s9, 4
      %s181 = int_to_ptr.hbm [resolvable:$true] %s180
      %183 = dma.vmem_to_hbm [thread:$0]  %s179, 128, %s181, [#allocation3]
    $region41: #{actor_forward.1} parent=1 // pred_fallthru
      _
    // Predicated region
    $region42: #{actor_forward.1} parent=1 // pred_check
      _
    $region43: #{actor_forward.1} parent=1 // pred_check_branch
      %185 = sbr.rel (0) target = $region45
    $region44: #{actor_forward.1} parent=1 // pred_region
      %187 = vsyncadd [#allocation5], 0
      %s189 = sshll.u32 [#allocation4], 4
      %s190 = int_to_ptr.vmem [resolvable:$true] %s189
      %s191 = sshll.u32 %s10, 4
      %s192 = int_to_ptr.hbm [resolvable:$true] %s191
      %194 = dma.vmem_to_hbm [thread:$0]  %s190, 128, %s192, [#allocation5]
    $region45: #{actor_forward.1} parent=1 // pred_fallthru
      _
    // Predicated region
    $region46: #{actor_forward.1} parent=1 // pred_check
      _
    $region47: #{actor_forward.1} parent=1 // pred_check_branch
      %196 = sbr.rel (0) target = $region49
    $region48: #{actor_forward.1} parent=1 // pred_region
      %198 = vsyncadd [#allocation5], 0
      %s200 = sshll.u32 [#allocation6], 4
      %s201 = int_to_ptr.vmem [resolvable:$true] %s200
      %s202 = sshll.u32 %s11, 4
      %s203 = int_to_ptr.hbm [resolvable:$true] %s202
      %205 = dma.vmem_to_hbm [thread:$0]  %s201, 128, %s203, [#allocation5]
    $region49: #{actor_forward.1} parent=1 // pred_fallthru
      _
    // Predicated region
    $region50: #{actor_forward.1} parent=1 // pred_check
      _
    $region51: #{actor_forward.1} parent=1 // pred_check_branch
      %207 = sbr.rel (0) target = $region53
    $region52: #{actor_forward.1} parent=1 // pred_region
      %209 = dma.done [#allocation3], 128
    $region53: #{actor_forward.1} parent=1 // pred_fallthru
      _
    // Predicated region
    $region54: #{actor_forward.1} parent=1 // pred_check
      _
    $region55: #{actor_forward.1} parent=1 // pred_check_branch
      %211 = sbr.rel (0) target = $region57
    $region56: #{actor_forward.1} parent=1 // pred_region
      %213 = dma.done [#allocation5], 128
    $region57: #{actor_forward.1} parent=1 // pred_fallthru
      _
    // Predicated region
    $region58: #{actor_forward.1} parent=1 // pred_check
      _
    $region59: #{actor_forward.1} parent=1 // pred_check_branch
      %215 = sbr.rel (0) target = $region61
    $region60: #{actor_forward.1} parent=1 // pred_region
      %217 = dma.done [#allocation5], 128
    $region61: #{actor_forward.1} parent=1 // pred_fallthru
      _
    %218 = vsyncpa [#allocation3], 1
    %219 = vsyncpa [#allocation5], 1

</llo_original>
